<compile_context>
chip_gen: v6e
topology: v6e:2x2x1
jax: 0.10.0
libtpu: 0.0.40
codegen_flags: <defaults>
</compile_context>

<pallas_src>
import jax
import jax.numpy as jnp
from jax.experimental import pallas as pl
from jax.experimental.pallas import tpu as pltpu


def se_layer_kernel(x_ref, w1_ref, b1_ref, w2_ref, b2_ref, o_ref):
    """One (B_t, C, L) block: squeeze -> excite -> scale, fully in VMEM."""
    inv_l = 1.0 / x_ref.shape[-1]

    # Squeeze: AdaptiveAvgPool1d(1) == mean over L.  f32 accumulation is fused
    # per-vreg into the lane reduce -- no full-block f32 temporary is bound.
    # TODO(synk): on v7x the cross-lane reduce could be offloaded to the idle
    # MXU (contraction against a ones vector) if the VPU/XLU pass ever binds.
    y = jnp.sum(x_ref[...].astype(jnp.float32), axis=-1) * inv_l      # (B_t, C)

    # Excitation: Linear -> ReLU -> Linear -> Sigmoid (tiny MXU matmuls,
    # negligible vs. the HBM-bound read/scale/write of x).
    h = jnp.dot(y, w1_ref[...], preferred_element_type=jnp.float32) + b1_ref[...]
    h = jnp.maximum(h, 0.0)                                           # (B_t, H)
    s = jnp.dot(h, w2_ref[...], preferred_element_type=jnp.float32) + b2_ref[...]
    s = jax.nn.sigmoid(s)                                             # (B_t, C)

    # Scale: materialize the channel gates once per block as a small
    # (B_t, C, 1) column in the I/O dtype, then stream the big multiply in the
    # I/O dtype (keeps bf16 on v6e/v7x; halves VPU work and avoids full-block
    # convert passes).
    s_col = s.astype(o_ref.dtype)[:, :, None]
    o_ref[...] = x_ref[...] * s_col


def _vmem_limit_bytes():
    """Per-TensorCore VMEM budget, clamped so v7x (64 MiB/TC) never over-reports."""
    per_tc_cap = 64 * 1024 * 1024
    cap = per_tc_cap
    try:
        cap = min(per_tc_cap, int(pltpu.get_tpu_info().vmem_capacity_bytes))
    except Exception:
        pass
    # Leave headroom for weights, semaphores and compiler-internal scratch.
    return max(32 * 1024 * 1024, (cap * 3) // 4)


# ~2-4 MiB x blocks already reach ~85% of HBM roofline; bigger tiles only
# collapse the grid (no DMA/compute overlap, idle TC on v7x megacore).
_X_BLOCK_BYTES_CAP = 4 * 1024 * 1024


def _choose_block_batch(B, C, L, itemsize, vmem_limit, block_batch=None):
    io_bytes_per_sample = C * L * itemsize
    f32_bytes_per_sample = C * L * 4            # worst-case f32 temporaries (v5e)
    # 2 input + 2 output double-buffered x tiles + one f32 temp slab of headroom.
    per_sample = 4 * io_bytes_per_sample + f32_bytes_per_sample

    budget = (vmem_limit * 3) // 4
    bt = budget // per_sample
    bt = min(bt, _X_BLOCK_BYTES_CAP // max(1, io_bytes_per_sample))
    # Guarantee a real multi-step grid (>=4 steps when B allows) so pipelining
    # overlaps DMA with compute and v7x can shard tiles across both cores.
    bt = min(bt, max(1, pl.cdiv(B, 4)))
    bt = max(1, min(int(bt), B))
    if block_batch is not None:
        bt = max(1, min(bt, int(block_batch)))
    # Round down to a divisor of B: no ragged tail tile (masked vst + padding DMA).
    while B % bt != 0:
        bt -= 1
    return bt


def se_layer(x, w1, b1, w2, b2, *, block_batch=None):
    """x: (B, C, L); w1: (C, H); b1: (1, H); w2: (H, C); b2: (1, C)."""
    B, C, L = x.shape
    H = w1.shape[1]

    # TODO(synk): if real workloads have ragged L (not a multiple of 128) or a
    # single sample's (C, L) slab exceeds the VMEM budget, pad/reshape L in the
    # wrapper (lane-dense stores) or split L into a trailing "arbitrary"
    # reduction axis (two-pass mean + scale).

    vmem_limit = _vmem_limit_bytes()
    bt = _choose_block_batch(B, C, L, x.dtype.itemsize, vmem_limit, block_batch)
    grid = (B // bt,)

    x_spec = pl.BlockSpec((bt, C, L), lambda i: (i, 0, 0))
    w_spec = lambda shape: pl.BlockSpec(shape, lambda i: (0, 0))

    itemsize = x.dtype.itemsize
    cost = pl.CostEstimate(
        flops=2 * B * C * L + 4 * B * C * H,          # mean+scale + two tiny matmuls
        transcendentals=B * C,                         # sigmoid
        bytes_accessed=2 * B * C * L * itemsize
        + (C * H + H + H * C + C) * w1.dtype.itemsize,
    )

    return pl.pallas_call(
        se_layer_kernel,
        out_shape=jax.ShapeDtypeStruct((B, C, L), x.dtype),
        grid=grid,
        in_specs=[
            x_spec,
            w_spec((C, H)),
            w_spec((1, H)),
            w_spec((H, C)),
            w_spec((1, C)),
        ],
        out_specs=x_spec,
        compiler_params=pltpu.CompilerParams(
            dimension_semantics=("parallel",),   # shard B tiles across TCs on v7x
            vmem_limit_bytes=vmem_limit,
        ),
        cost_estimate=cost,
    )(x, w1, b1, w2, b2)


def se_layer_ref(x, w1, b1, w2, b2):
    """Pure-JAX reference mirroring the PyTorch forward."""
    y = jnp.mean(x.astype(jnp.float32), axis=-1)
    h = jnp.maximum(y @ w1 + b1, 0.0)
    s = jax.nn.sigmoid(h @ w2 + b2)
    return (x.astype(jnp.float32) * s[:, :, None]).astype(x.dtype)


if __name__ == "__main__":
    # SELayer(channel=32, reduction=16) -> hidden H = 2.  Input is (B, C, L);
    # L = 128 keeps the output lane axis dense (unmasked vector stores).
    B, C, L = 4, 32, 128
    reduction = 16
    H = C // reduction

    key = jax.random.PRNGKey(0)
    kx, k1, k2, k3, k4 = jax.random.split(key, 5)

    x = jax.random.normal(kx, (B, C, L), dtype=jnp.float32)

    # PyTorch Linear weight is (out, in); pass them pre-transposed to (in, out).
    w1 = jax.random.normal(k1, (C, H), dtype=jnp.float32) * (1.0 / jnp.sqrt(C))
    b1 = jax.random.normal(k2, (1, H), dtype=jnp.float32) * 0.01
    w2 = jax.random.normal(k3, (H, C), dtype=jnp.float32) * (1.0 / jnp.sqrt(H))
    b2 = jax.random.normal(k4, (1, C), dtype=jnp.float32) * 0.01

    # With B=4 the block-batch heuristic yields bt=1 -> grid=(4,), exercising
    # the tiled / double-buffered path.
    out = se_layer(x, w1, b1, w2, b2)
    out = jax.block_until_ready(out)

    ref = se_layer_ref(x, w1, b1, w2, b2)
    assert out.shape == (B, C, L)
    assert jnp.allclose(out, ref, atol=1e-5, rtol=1e-5), "mismatch vs reference"

    print("KERNEL_OK")
</pallas_src>

<mosaic_0001>
module attributes {stable_mosaic.version = 11 : i64} {
  func.func @se_layer_kernel(%arg0: i32, %arg1: memref<1x32x128xf32, #tpu.memory_space<vmem>>, %arg2: memref<32x2xf32, #tpu.memory_space<vmem>>, %arg3: memref<1x2xf32, #tpu.memory_space<vmem>>, %arg4: memref<2x32xf32, #tpu.memory_space<vmem>>, %arg5: memref<1x32xf32, #tpu.memory_space<vmem>>, %arg6: memref<1x32x128xf32, #tpu.memory_space<vmem>>) attributes {dimension_semantics = [#tpu.dimension_semantics<parallel>], iteration_bounds = array<i64: 4>, scalar_prefetch = 0 : i64, scratch_operands = 0 : i64, tpu.core_type = #tpu.core_type<tc>, window_params = [{transform_indices = @transform_0, window_bounds = array<i64: 1, 32, 128>}, {pipeline_mode = #tpu.pipeline_mode<synchronous>, transform_indices = @transform_1, window_bounds = array<i64: 32, 2>}, {pipeline_mode = #tpu.pipeline_mode<synchronous>, transform_indices = @transform_2, window_bounds = array<i64: 1, 2>}, {pipeline_mode = #tpu.pipeline_mode<synchronous>, transform_indices = @transform_3, window_bounds = array<i64: 2, 32>}, {pipeline_mode = #tpu.pipeline_mode<synchronous>, transform_indices = @transform_4, window_bounds = array<i64: 1, 32>}, {transform_indices = @transform_5, window_bounds = array<i64: 1, 32, 128>}]} {
    %c0 = arith.constant 0 : index
    %c0_0 = arith.constant 0 : index
    %c0_1 = arith.constant 0 : index
    %0 = vector.load %arg1[%c0, %c0_0, %c0_1] : memref<1x32x128xf32, #tpu.memory_space<vmem>>, vector<1x32x128xf32>
    %cst = arith.constant dense<0.000000e+00> : vector<1x32xf32>
    %1 = vector.multi_reduction <add>, %0, %cst [2] : vector<1x32x128xf32> to vector<1x32xf32>
    %cst_2 = arith.constant 7.812500e-03 : f32
    %2 = vector.broadcast %cst_2 : f32 to vector<1x32xf32>
    %3 = arith.mulf %1, %2 : vector<1x32xf32>
    %c0_3 = arith.constant 0 : index
    %c0_4 = arith.constant 0 : index
    %4 = vector.load %arg2[%c0_3, %c0_4] : memref<32x2xf32, #tpu.memory_space<vmem>>, vector<32x2xf32>
    %cst_5 = arith.constant dense<0.000000e+00> : vector<1x2xf32>
    %5 = tpu.matmul %3, %4, %cst_5 {dimension_numbers = #tpu.dot_dimension_numbers<[1], [0], [0], [1], [0, 0, 1, 1], [], []>} : vector<1x32xf32>, vector<32x2xf32>, vector<1x2xf32> -> vector<1x2xf32>
    %c0_6 = arith.constant 0 : index
    %c0_7 = arith.constant 0 : index
    %6 = vector.load %arg3[%c0_6, %c0_7] : memref<1x2xf32, #tpu.memory_space<vmem>>, vector<1x2xf32>
    %7 = arith.addf %5, %6 : vector<1x2xf32>
    %cst_8 = arith.constant 0.000000e+00 : f32
    %8 = vector.broadcast %cst_8 : f32 to vector<1x2xf32>
    %9 = arith.maximumf %7, %8 : vector<1x2xf32>
    %c0_9 = arith.constant 0 : index
    %c0_10 = arith.constant 0 : index
    %10 = vector.load %arg4[%c0_9, %c0_10] : memref<2x32xf32, #tpu.memory_space<vmem>>, vector<2x32xf32>
    %cst_11 = arith.constant dense<0.000000e+00> : vector<1x32xf32>
    %11 = tpu.matmul %9, %10, %cst_11 {dimension_numbers = #tpu.dot_dimension_numbers<[1], [0], [0], [1], [0, 0, 1, 1], [], []>} : vector<1x2xf32>, vector<2x32xf32>, vector<1x32xf32> -> vector<1x32xf32>
    %c0_12 = arith.constant 0 : index
    %c0_13 = arith.constant 0 : index
    %12 = vector.load %arg5[%c0_12, %c0_13] : memref<1x32xf32, #tpu.memory_space<vmem>>, vector<1x32xf32>
    %13 = arith.addf %11, %12 : vector<1x32xf32>
    %14 = arith.negf %13 : vector<1x32xf32>
    %15 = math.exp %14 : vector<1x32xf32>
    %cst_14 = arith.constant 1.000000e+00 : f32
    %16 = vector.broadcast %cst_14 : f32 to vector<1x32xf32>
    %17 = arith.addf %16, %15 : vector<1x32xf32>
    %18 = arith.divf %16, %17 : vector<1x32xf32>
    %19 = vector.shape_cast %18 : vector<1x32xf32> to vector<1x32x1xf32>
    %c0_15 = arith.constant 0 : index
    %c0_16 = arith.constant 0 : index
    %c0_17 = arith.constant 0 : index
    %20 = vector.load %arg1[%c0_15, %c0_16, %c0_17] : memref<1x32x128xf32, #tpu.memory_space<vmem>>, vector<1x32x128xf32>
    %21 = vector.broadcast %19 : vector<1x32x1xf32> to vector<1x32x128xf32>
    %22 = arith.mulf %20, %21 : vector<1x32x128xf32>
    %c0_18 = arith.constant 0 : index
    %c0_19 = arith.constant 0 : index
    %c0_20 = arith.constant 0 : index
    %23 = vector.load %arg6[%c0_18, %c0_19, %c0_20] : memref<1x32x128xf32, #tpu.memory_space<vmem>>, vector<1x32x128xf32>
    tpu.vector_store %arg6[%c0_18, %c0_19, %c0_20], %22 {strides = array<i32>} : memref<1x32x128xf32, #tpu.memory_space<vmem>>, vector<1x32x128xf32>,
    return
  }
  func.func @transform_0(%arg0: i32) -> (i32, i32, i32) {
    %c0_i32 = arith.constant 0 : i32
    %c0_i32_0 = arith.constant 0 : i32
    %c0_i32_1 = arith.constant 0 : i32
    return %arg0, %c0_i32, %c0_i32_0 : i32, i32, i32
  }
  func.func @transform_1(%arg0: i32) -> (i32, i32) {
    %c0_i32 = arith.constant 0 : i32
    %c0_i32_0 = arith.constant 0 : i32
    %c0_i32_1 = arith.constant 0 : i32
    return %c0_i32, %c0_i32_0 : i32, i32
  }
  func.func @transform_2(%arg0: i32) -> (i32, i32) {
    %c0_i32 = arith.constant 0 : i32
    %c0_i32_0 = arith.constant 0 : i32
    %c0_i32_1 = arith.constant 0 : i32
    return %c0_i32, %c0_i32_0 : i32, i32
  }
  func.func @transform_3(%arg0: i32) -> (i32, i32) {
    %c0_i32 = arith.constant 0 : i32
    %c0_i32_0 = arith.constant 0 : i32
    %c0_i32_1 = arith.constant 0 : i32
    return %c0_i32, %c0_i32_0 : i32, i32
  }
  func.func @transform_4(%arg0: i32) -> (i32, i32) {
    %c0_i32 = arith.constant 0 : i32
    %c0_i32_0 = arith.constant 0 : i32
    %c0_i32_1 = arith.constant 0 : i32
    return %c0_i32, %c0_i32_0 : i32, i32
  }
  func.func @transform_5(%arg0: i32) -> (i32, i32, i32) {
    %c0_i32 = arith.constant 0 : i32
    %c0_i32_0 = arith.constant 0 : i32
    %c0_i32_1 = arith.constant 0 : i32
    return %arg0, %c0_i32, %c0_i32_0 : i32, i32, i32
  }
}

</mosaic_0001>

<llo_original>
// kernel: tpu_custom_call.1
$region0: #{tpu_custom_call.1}
  #allocation0 [shape = 'u32[]', space=smem, size = 0x4, offset = 0x4, fixed_abs, tag = 'smem constant byte address 0x4 - core index']
  #allocation1 [shape = 'u32[144,128]{1,0:T(1,128)}', space=vmem, size = 0x12000, scoped, tag = 'internal scratch']
  %s0 = inlined_call_operand.hbm [shape: f32[4,32,128], index: 0, kind: input, shape index: {}]
  %s1 = inlined_call_operand.vmem [shape: f32[32,2], index: 1, kind: input, shape index: {}]
  %s2 = inlined_call_operand.vmem [shape: f32[1,2], index: 2, kind: input, shape index: {}]
  %s3 = inlined_call_operand.vmem [shape: f32[2,32], index: 3, kind: input, shape index: {}]
  %s4 = inlined_call_operand.vmem [shape: f32[1,32], index: 4, kind: input, shape index: {}]
  %s5 = inlined_call_operand.hbm [shape: f32[4,32,128], index: 5, kind: output, shape index: {}]
  %s6 = sld [smem:[#allocation0]]
  $region57: #{tpu_custom_call.1} parent=0
    _
  %s8 = ssub.s32 1, %s6
  %s9 = scalar_select 0, %s8, %s6
  $region1: #{tpu_custom_call.1} parent=0
    #allocation2 [shape = 'u8[32768]{0}', space=vmem, size = 0x8000, scoped, tag = 'input window, operand 0']
    #allocation3 [shape = 's32[2]{0}', space=sflag, size = 0x8, scoped, tag = 'scoped memory for tpu_custom_call.1']
    #allocation4 [shape = 's32[2]{0}', space=sflag, size = 0x8, scoped, tag = 'scoped memory for tpu_custom_call.1']
    #allocation5 [shape = 'u8[32768]{0}', space=vmem, size = 0x8000, scoped, tag = 'output window, operand 0']
    %10 = vsyncpa [#allocation3], 0
    %s11 = scalar_lea.sflag [#allocation3], 1
    %12 = vsyncpa %s11, 0
    %13 = vsyncpa [#allocation4], 0
    %s14 = scalar_lea.sflag [#allocation4], 1
    %15 = vsyncpa %s14, 0
    loop: start=0, step=1, limit=6
    $region2: #{tpu_custom_call.1} parent=1 // loop_pre_header
      _
    $region3: #{tpu_custom_call.1} parent=1 // loop_header
      %s17 = sphi 0, %s21
      %p18 = scmp.ge.s32.totalorder %s17, 6
      %s27 = sphi 0, %s29
      %s30 = sphi 0, %s27
      %s31 = sphi 0, %s30
      %s47 = sphi 0, %s31
      %s51 = sphi 0, %s51
      %s53 = sphi 0, %s51
      %s54 = sphi 0, %s53
      %s68 = sphi 0, %s54
      %s72 = sphi 0, %s72
      %s74 = sphi 0, %s72
      %s75 = sphi 0, %s74
      %s89 = sphi 0, %s75
      %s93 = sphi 0, %s93
      %s95 = sphi 0, %s93
      %s96 = sphi 0, %s95
      %s110 = sphi 0, %s96
      %s114 = sphi 0, %s114
      %s116 = sphi 0, %s114
      %s117 = sphi 0, %s116
      %s131 = sphi 0, %s117
      %s137 = sphi 0, %s139
      %s140 = sphi 0, %s137
      %s141 = sphi 0, %s140
      %s157 = sphi 0, %s141
    $region4: #{tpu_custom_call.1} parent=1 // loop_header_branch
      %20 = sbr.rel (%p18) target = $region8
    $region5: #{tpu_custom_call.1} parent=1 // loop_body
      %s22 = ssub.s32 %s17, 1
      %s23 = ssub.s32 %s17, 2
      %s24 = sadd.s32 %s17, 1
      %s25 = ssub.s32 %s17, %s24
      %p26 = scmp.eq.s32.totalorder %s25, 0
      %s28 = sadd.s32 %s27, 1
      %s29 = scalar_select %p26, %s27, %s28
      %p32 = pneg %p26
      %p33 = scmp.eq.s32.totalorder %s17, 3
      %p34 = por %p32, %p33
      %p35 = scmp.ne.s32.totalorder %s27, %s30
      %p36 = scmp.eq.s32.totalorder %s17, 0
      %p37 = por %p35, %p36
      %p38 = scmp.ne.s32.totalorder %s27, %s30
      %p39 = scmp.eq.s32.totalorder %s22, 3
      %p40 = por %p38, %p39
      %p41 = scmp.ne.s32.totalorder %s30, %s31
      %p42 = scmp.eq.s32.totalorder %s22, 0
      %p43 = por %p41, %p42
      %p44 = scmp.ne.s32.totalorder %s30, %s31
      %p45 = scmp.eq.s32.totalorder %s23, 3
      %p46 = por %p44, %p45
      %p48 = scmp.ne.s32.totalorder %s31, %s47
      %p49 = scmp.eq.s32.totalorder %s23, 0
      %p50 = por %p48, %p49
      %s52 = sadd.s32 %s51, 1
      %p55 = scmp.eq.s32.totalorder %s17, 3
      %p56 = scmp.ne.s32.totalorder %s51, %s53
      %p57 = scmp.eq.s32.totalorder %s17, 0
      %p58 = por %p56, %p57
      %p59 = scmp.ne.s32.totalorder %s51, %s53
      %p60 = scmp.eq.s32.totalorder %s22, 3
      %p61 = por %p59, %p60
      %p62 = scmp.ne.s32.totalorder %s53, %s54
      %p63 = scmp.eq.s32.totalorder %s22, 0
      %p64 = por %p62, %p63
      %p65 = scmp.ne.s32.totalorder %s53, %s54
      %p66 = scmp.eq.s32.totalorder %s23, 3
      %p67 = por %p65, %p66
      %p69 = scmp.ne.s32.totalorder %s54, %s68
      %p70 = scmp.eq.s32.totalorder %s23, 0
      %p71 = por %p69, %p70
      %s73 = sadd.s32 %s72, 1
      %p76 = scmp.eq.s32.totalorder %s17, 3
      %p77 = scmp.ne.s32.totalorder %s72, %s74
      %p78 = scmp.eq.s32.totalorder %s17, 0
      %p79 = por %p77, %p78
      %p80 = scmp.ne.s32.totalorder %s72, %s74
      %p81 = scmp.eq.s32.totalorder %s22, 3
      %p82 = por %p80, %p81
      %p83 = scmp.ne.s32.totalorder %s74, %s75
      %p84 = scmp.eq.s32.totalorder %s22, 0
      %p85 = por %p83, %p84
      %p86 = scmp.ne.s32.totalorder %s74, %s75
      %p87 = scmp.eq.s32.totalorder %s23, 3
      %p88 = por %p86, %p87
      %p90 = scmp.ne.s32.totalorder %s75, %s89
      %p91 = scmp.eq.s32.totalorder %s23, 0
      %p92 = por %p90, %p91
      %s94 = sadd.s32 %s93, 1
      %p97 = scmp.eq.s32.totalorder %s17, 3
      %p98 = scmp.ne.s32.totalorder %s93, %s95
      %p99 = scmp.eq.s32.totalorder %s17, 0
      %p100 = por %p98, %p99
      %p101 = scmp.ne.s32.totalorder %s93, %s95
      %p102 = scmp.eq.s32.totalorder %s22, 3
      %p103 = por %p101, %p102
      %p104 = scmp.ne.s32.totalorder %s95, %s96
      %p105 = scmp.eq.s32.totalorder %s22, 0
      %p106 = por %p104, %p105
      %p107 = scmp.ne.s32.totalorder %s95, %s96
      %p108 = scmp.eq.s32.totalorder %s23, 3
      %p109 = por %p107, %p108
      %p111 = scmp.ne.s32.totalorder %s96, %s110
      %p112 = scmp.eq.s32.totalorder %s23, 0
      %p113 = por %p111, %p112
      %s115 = sadd.s32 %s114, 1
      %p118 = scmp.eq.s32.totalorder %s17, 3
      %p119 = scmp.ne.s32.totalorder %s114, %s116
      %p120 = scmp.eq.s32.totalorder %s17, 0
      %p121 = por %p119, %p120
      %p122 = scmp.ne.s32.totalorder %s114, %s116
      %p123 = scmp.eq.s32.totalorder %s22, 3
      %p124 = por %p122, %p123
      %p125 = scmp.ne.s32.totalorder %s116, %s117
      %p126 = scmp.eq.s32.totalorder %s22, 0
      %p127 = por %p125, %p126
      %p128 = scmp.ne.s32.totalorder %s116, %s117
      %p129 = scmp.eq.s32.totalorder %s23, 3
      %p130 = por %p128, %p129
      %p132 = scmp.ne.s32.totalorder %s117, %s131
      %p133 = scmp.eq.s32.totalorder %s23, 0
      %p134 = por %p132, %p133
      %s135 = ssub.s32 %s17, %s24
      %p136 = scmp.eq.s32.totalorder %s135, 0
      %s138 = sadd.s32 %s137, 1
      %s139 = scalar_select %p136, %s137, %s138
      %p142 = pneg %p136
      %p143 = scmp.eq.s32.totalorder %s17, 3
      %p144 = por %p142, %p143
      %p145 = scmp.ne.s32.totalorder %s137, %s140
      %p146 = scmp.eq.s32.totalorder %s17, 0
      %p147 = por %p145, %p146
      %p148 = scmp.ne.s32.totalorder %s137, %s140
      %p149 = scmp.eq.s32.totalorder %s22, 3
      %p150 = por %p148, %p149
      %p151 = scmp.ne.s32.totalorder %s140, %s141
      %p152 = scmp.eq.s32.totalorder %s22, 0
      %p153 = por %p151, %p152
      %p154 = scmp.ne.s32.totalorder %s140, %s141
      %p155 = scmp.eq.s32.totalorder %s23, 3
      %p156 = por %p154, %p155
      %p158 = scmp.ne.s32.totalorder %s141, %s157
      %p159 = scmp.eq.s32.totalorder %s23, 0
      %p160 = por %p158, %p159
      %p161 = scmp.le.s32.totalorder 1, %s17
      %p162 = scmp.lt.s32.totalorder %s17, 5
      %p163 = pnand %p161, %p162
      %p164 = pneg %p163
      // Predicated region
      $region9: #{tpu_custom_call.1} parent=5 // pred_check
        _
      $region10: #{tpu_custom_call.1} parent=5 // pred_check_branch
        %166 = sbr.rel (%p163) target = $region12
      $region11: #{tpu_custom_call.1} parent=5 // pred_region
        %s167 = ssub.s32 %s17, 1
        // Predicated region
        $region13: #{tpu_custom_call.1} parent=11 // pred_check
          %p168 = pneg %p64
        $region14: #{tpu_custom_call.1} parent=11 // pred_check_branch
          %170 = sbr.rel (%p168) target = $region16
        $region15: #{tpu_custom_call.1} parent=11 // pred_region
          _
        $region16: #{tpu_custom_call.1} parent=11 // pred_fallthru
          _
        // Predicated region
        $region17: #{tpu_custom_call.1} parent=11 // pred_check
          %p171 = pneg %p85
        $region18: #{tpu_custom_call.1} parent=11 // pred_check_branch
          %173 = sbr.rel (%p171) target = $region20
        $region19: #{tpu_custom_call.1} parent=11 // pred_region
          _
        $region20: #{tpu_custom_call.1} parent=11 // pred_fallthru
          _
        // Predicated region
        $region21: #{tpu_custom_call.1} parent=11 // pred_check
          %p174 = pneg %p106
        $region22: #{tpu_custom_call.1} parent=11 // pred_check_branch
          %176 = sbr.rel (%p174) target = $region24
        $region23: #{tpu_custom_call.1} parent=11 // pred_region
          _
        $region24: #{tpu_custom_call.1} parent=11 // pred_fallthru
          _
        // Predicated region
        $region25: #{tpu_custom_call.1} parent=11 // pred_check
          %p177 = pneg %p127
        $region26: #{tpu_custom_call.1} parent=11 // pred_check_branch
          %179 = sbr.rel (%p177) target = $region28
        $region27: #{tpu_custom_call.1} parent=11 // pred_region
          _
        $region28: #{tpu_custom_call.1} parent=11 // pred_fallthru
          _
      $region12: #{tpu_custom_call.1} parent=5 // pred_fallthru
        _
      %p180 = scmp.lt.s32.totalorder %s17, 4
      // Predicated region
      $region29: #{tpu_custom_call.1} parent=5 // pred_check
        %p181 = pneg %p180
      $region30: #{tpu_custom_call.1} parent=5 // pred_check_branch
        %183 = sbr.rel (%p181) target = $region32
      $region31: #{tpu_custom_call.1} parent=5 // pred_region
        // Predicated region
        $region33: #{tpu_custom_call.1} parent=31 // pred_check
          %p184 = pneg %p37
        $region34: #{tpu_custom_call.1} parent=31 // pred_check_branch
          %186 = sbr.rel (%p184) target = $region36
        $region35: #{tpu_custom_call.1} parent=31 // pred_region
          %s187 = sand.u32 %s27, 1
          %s188 = scalar_lea.sflag [#allocation3], %s187
          %s189 = sand.u32 %s27, 1
          %s190 = smul.addr %s189, 32
          %s191 = scalar_lea.vmem [#allocation2], %s190
          %s193 = ssub.s32 512, 512
          %194 = vsyncadd %s188, %s193
          %s195 = smul.addr %s17, 4
          %s196 = smul.addr %s195, 128
          %s197 = scalar_lea.hbm %s0, %s196
          %s198 = sshll.u32 %s191, 4
          %s199 = int_to_ptr.vmem [resolvable:$true] %s198
          %204 = dma.hbm_to_vmem [thread:$0]  %s197, 512, %s199, %s188, 128, 128, 8
        $region36: #{tpu_custom_call.1} parent=31 // pred_fallthru
          _
      $region32: #{tpu_custom_call.1} parent=5 // pred_fallthru
        _
      %p205 = scmp.le.s32.totalorder 1, %s17
      %p206 = scmp.lt.s32.totalorder %s17, 5
      %p207 = pnand %p205, %p206
      %p208 = pneg %p207
      // Predicated region
      $region37: #{tpu_custom_call.1} parent=5 // pred_check
        _
      $region38: #{tpu_custom_call.1} parent=5 // pred_check_branch
        %210 = sbr.rel (%p207) target = $region40
      $region39: #{tpu_custom_call.1} parent=5 // pred_region
        %s211 = ssub.s32 %s17, 1
        %s212 = sand.u32 %s30, 1
        %s213 = scalar_lea.sflag [#allocation3], %s212
        %s214 = sand.u32 %s30, 1
        %s215 = smul.addr %s214, 32
        %s216 = scalar_lea.vmem [#allocation2], %s215
        // Predicated region
        $region41: #{tpu_custom_call.1} parent=39 // pred_check
          %p217 = pneg %p43
        $region42: #{tpu_custom_call.1} parent=39 // pred_check_branch
          %219 = sbr.rel (%p217) target = $region44
        $region43: #{tpu_custom_call.1} parent=39 // pred_region
          %220 = dma.done %s213, 512
        $region44: #{tpu_custom_call.1} parent=39 // pred_fallthru
          _
        %s221 = sand.u32 %s30, 1
        %s222 = scalar_lea.sflag [#allocation3], %s221
        %s223 = sand.u32 %s30, 1
        %s224 = smul.addr %s223, 32
        %s225 = scalar_lea.vmem [#allocation2], %s224
        %p226 = pneg %p43
        %p227 = pneg %p40
        %p228 = pneg %p64
        %p229 = pneg %p61
        %p230 = pneg %p85
        %p231 = pneg %p82
        %p232 = pneg %p106
        %p233 = pneg %p103
        %p234 = pneg %p127
        %p235 = pneg %p124
        %p236 = pneg %p153
        %p237 = pneg %p150
        %s238 = sand.u32 %s140, 1
        %s239 = scalar_lea.sflag [#allocation4], %s238
        %s240 = sand.u32 %s140, 1
        %s241 = smul.addr %s240, 32
        %s242 = scalar_lea.vmem [#allocation5], %s241
        %v243 = vld [vmem:[%s216] sm:$0xff]
        %v244 = vld [vmem:[%s216 + $0x8] sm:$0xff]
        %v245 = vld [vmem:[%s216 + $0x10] sm:$0xff]
        %v246 = vld [vmem:[%s216 + $0x18] sm:$0xff]
        %247 = vadd.xlane.f32.xlu0 %v243
        %v248 = vpop.xlane.xlu0 %247
        %249 = vadd.xlane.f32.xlu0 %v244
        %v250 = vpop.xlane.xlu0 %249
        %251 = vadd.xlane.f32.xlu0 %v245
        %v252 = vpop.xlane.xlu0 %251
        %253 = vadd.xlane.f32.xlu0 %v246
        %v254 = vpop.xlane.xlu0 %253
        %v255 = vmul.f32 %v248, 0.0078125
        %v256 = vmul.f32 %v250, 0.0078125
        %v257 = vmul.f32 %v252, 0.0078125
        %v258 = vmul.f32 %v254, 0.0078125
        %v259 = vld [vmem:[%s1] sm:$0xff]
        %v260 = vld [vmem:[%s1 + $0x8] sm:$0xff]
        %v261 = vld [vmem:[%s1 + $0x10] sm:$0xff]
        %v262 = vld [vmem:[%s1 + $0x18] sm:$0xff]
        %v263 = vld [vmem:[%s2] sm:$0x1]
        %v268 = vlaneseq
        %v269 = vand.u32 %v268, 127
        %v270 = vlaneseq
        %v271 = vshrl.u32 %v270, 7
        %v272 = vsub.s32 %v269, %v271
        %v273 = vrot.slane %v255, %v272
        %v274 = vadd.s32 %v269, 4294967288
        %v275 = vlaneseq
        %v276 = vshrl.u32 %v275, 7
        %v277 = vsub.s32 %v274, %v276
        %v278 = vrot.slane %v256, %v277
        %vm279 = vcmask 130112
        %v280 = vsel %vm279, %v278, %v273
        %v281 = vadd.s32 %v269, 4294967280
        %v282 = vlaneseq
        %v283 = vshrl.u32 %v282, 7
        %v284 = vsub.s32 %v281, %v283
        %v285 = vrot.slane %v257, %v284
        %vm286 = vcmask 195712
        %v287 = vsel %vm286, %v285, %v280
        %v288 = vadd.s32 %v269, 4294967272
        %v289 = vlaneseq
        %v290 = vshrl.u32 %v289, 7
        %v291 = vsub.s32 %v288, %v290
        %v292 = vrot.slane %v258, %v291
        %vm293 = vcmask 261312
        %v294 = vsel %vm293, %v292, %v287
        %vm295 = vcmask 261120
        %v296 = vsel %vm295, %v294, 0
        %298 = vmatprep.subr.mxu0 0.0
        %299 = vmatpush1.msra.mxu0 0.0
        %300 = vmatprep.subr.mxu0 0.0
        %301 = vmatpush1.msra.mxu0 0.0
        %302 = vmatprep.subr.mxu0 0.0
        %303 = vmatpush1.msra.mxu0 0.0
        %304 = vmatprep.subr.mxu0 0.0
        %305 = vmatpush1.msra.mxu0 0.0
        %306 = vmatprep.subr.mxu0 0.0
        %307 = vmatpush1.msra.mxu0 0.0
        %308 = vmatprep.subr.mxu0 0.0
        %309 = vmatpush1.msra.mxu0 0.0
        %310 = vmatprep.subr.mxu0 0.0
        %311 = vmatpush1.msra.mxu0 0.0
        %312 = vmatprep.subr.mxu0 0.0
        %313 = vmatpush1.msra.mxu0 0.0
        %314 = vmatprep.subr.mxu0 0.0
        %315 = vmatpush1.msra.mxu0 0.0
        %316 = vmatprep.subr.mxu0 0.0
        %317 = vmatpush1.msra.mxu0 0.0
        %318 = vmatprep.subr.mxu0 0.0
        %319 = vmatpush1.msra.mxu0 0.0
        %320 = vmatprep.subr.mxu0 0.0
        %321 = vmatpush1.msra.mxu0 0.0
        %322 = vmatprep.subr.mxu0 0.0
        %323 = vmatpush1.msra.mxu0 %v262
        %324 = vmatprep.subr.mxu0 0.0
        %325 = vmatpush1.msra.mxu0 %v261
        %326 = vmatprep.subr.mxu0 0.0
        %327 = vmatpush1.msra.mxu0 %v260
        %328 = vmatprep.subr.mxu0 0.0
        %329 = vmatpush1.msra.mxu0 %v259
        %330 = vmatprep.subr.mxu0 0.0
        %331 = vmatpush2.msra.mxu0 0.0
        %332 = vmatprep.subr.mxu0 0.0
        %333 = vmatpush2.msra.mxu0 0.0
        %334 = vmatprep.subr.mxu0 0.0
        %335 = vmatpush2.msra.mxu0 0.0
        %336 = vmatprep.subr.mxu0 0.0
        %337 = vmatpush2.msra.mxu0 0.0
        %338 = vmatprep.subr.mxu0 0.0
        %339 = vmatpush2.msra.mxu0 0.0
        %340 = vmatprep.subr.mxu0 0.0
        %341 = vmatpush2.msra.mxu0 0.0
        %342 = vmatprep.subr.mxu0 0.0
        %343 = vmatpush2.msra.mxu0 0.0
        %344 = vmatprep.subr.mxu0 0.0
        %345 = vmatpush2.msra.mxu0 0.0
        %346 = vmatprep.subr.mxu0 0.0
        %347 = vmatpush2.msra.mxu0 0.0
        %348 = vmatprep.subr.mxu0 0.0
        %349 = vmatpush2.msra.mxu0 0.0
        %350 = vmatprep.subr.mxu0 0.0
        %351 = vmatpush2.msra.mxu0 0.0
        %352 = vmatprep.subr.mxu0 0.0
        %353 = vmatpush2.msra.mxu0 0.0
        %354 = vmatprep.subr.mxu0 0.0
        %355 = vmatpush2.msra.mxu0 0.0
        %356 = vmatprep.subr.mxu0 0.0
        %357 = vmatpush2.msra.mxu0 0.0
        %358 = vmatprep.subr.mxu0 0.0
        %359 = vmatpush2.msra.mxu0 0.0
        %360 = vmatprep.subr.mxu0 0.0
        %361 = vmatpush2.msra.mxu0 0.0
        %362 = vmatprep.mubr.f32.mxu0 0.0
        %363 = vmatmul.mubr.f32.gmra.mxu0 %v296
        %v364 = vpop.f32.mrf.mxu0
        %v365 = vadd.f32 %v263, %v364
        %v366 = vpop.f32.mrf.mxu0
        %367 = vdwg.mxu0
        %v368 = vmax.f32 %v365, 0.0
        %v369 = vld [vmem:[%s3] sm:$0x3]
        %v370 = vld [vmem:[%s4] sm:$0x1]
        %vm371 = vcmask 15360
        %v373 = vsel %vm371, %v368, 0
        %vm375 = vcmask 1041408
        %v377 = vsel %vm375, %v369, 0
        %379 = vmatprep.subr.mxu0 0.0
        %380 = vmatpush1.msra.mxu0 0.0
        %381 = vmatprep.subr.mxu0 0.0
        %382 = vmatpush1.msra.mxu0 0.0
        %383 = vmatprep.subr.mxu0 0.0
        %384 = vmatpush1.msra.mxu0 0.0
        %385 = vmatprep.subr.mxu0 0.0
        %386 = vmatpush1.msra.mxu0 0.0
        %387 = vmatprep.subr.mxu0 0.0
        %388 = vmatpush1.msra.mxu0 0.0
        %389 = vmatprep.subr.mxu0 0.0
        %390 = vmatpush1.msra.mxu0 0.0
        %391 = vmatprep.subr.mxu0 0.0
        %392 = vmatpush1.msra.mxu0 0.0
        %393 = vmatprep.subr.mxu0 0.0
        %394 = vmatpush1.msra.mxu0 0.0
        %395 = vmatprep.subr.mxu0 0.0
        %396 = vmatpush1.msra.mxu0 0.0
        %397 = vmatprep.subr.mxu0 0.0
        %398 = vmatpush1.msra.mxu0 0.0
        %399 = vmatprep.subr.mxu0 0.0
        %400 = vmatpush1.msra.mxu0 0.0
        %401 = vmatprep.subr.mxu0 0.0
        %402 = vmatpush1.msra.mxu0 0.0
        %403 = vmatprep.subr.mxu0 0.0
        %404 = vmatpush1.msra.mxu0 0.0
        %405 = vmatprep.subr.mxu0 0.0
        %406 = vmatpush1.msra.mxu0 0.0
        %407 = vmatprep.subr.mxu0 0.0
        %408 = vmatpush1.msra.mxu0 0.0
        %409 = vmatprep.subr.mxu0 0.0
        %410 = vmatpush1.msra.mxu0 %v377
        %411 = vmatprep.subr.mxu0 0.0
        %412 = vmatpush2.msra.mxu0 0.0
        %413 = vmatprep.subr.mxu0 0.0
        %414 = vmatpush2.msra.mxu0 0.0
        %415 = vmatprep.subr.mxu0 0.0
        %416 = vmatpush2.msra.mxu0 0.0
        %417 = vmatprep.subr.mxu0 0.0
        %418 = vmatpush2.msra.mxu0 0.0
        %419 = vmatprep.subr.mxu0 0.0
        %420 = vmatpush2.msra.mxu0 0.0
        %421 = vmatprep.subr.mxu0 0.0
        %422 = vmatpush2.msra.mxu0 0.0
        %423 = vmatprep.subr.mxu0 0.0
        %424 = vmatpush2.msra.mxu0 0.0
        %425 = vmatprep.subr.mxu0 0.0
        %426 = vmatpush2.msra.mxu0 0.0
        %427 = vmatprep.subr.mxu0 0.0
        %428 = vmatpush2.msra.mxu0 0.0
        %429 = vmatprep.subr.mxu0 0.0
        %430 = vmatpush2.msra.mxu0 0.0
        %431 = vmatprep.subr.mxu0 0.0
        %432 = vmatpush2.msra.mxu0 0.0
        %433 = vmatprep.subr.mxu0 0.0
        %434 = vmatpush2.msra.mxu0 0.0
        %435 = vmatprep.subr.mxu0 0.0
        %436 = vmatpush2.msra.mxu0 0.0
        %437 = vmatprep.subr.mxu0 0.0
        %438 = vmatpush2.msra.mxu0 0.0
        %439 = vmatprep.subr.mxu0 0.0
        %440 = vmatpush2.msra.mxu0 0.0
        %441 = vmatprep.subr.mxu0 0.0
        %442 = vmatpush2.msra.mxu0 0.0
        %443 = vmatprep.mubr.f32.mxu0 0.0
        %444 = vmatmul.mubr.f32.gmra.mxu0 %v373
        %v445 = vpop.f32.mrf.mxu0
        %v446 = vadd.f32 %v370, %v445
        %v447 = vpop.f32.mrf.mxu0
        %448 = vdwg.mxu0
        %v449 = vxor.u32 %v446, 2147483648
        %v450 = vmul.f32 %v449, 1.442695
        %v451 = vpow.pop %v450
        %v452 = vadd.f32 %v451, 1.0
        %v453 = vrcp.pop %v452
        %v454 = vmul.f32 1.0, %v453
        %v455 = vlaneseq
        %v456 = vshrl.u32 %v455, 7
        %v457 = vsub.s32 0, %v456
        %v458 = vrot.slane %v454, %v457
        %460 = vbcast.lane.b32.xlu0 %v458, 256
        %v461 = vpop.permute.xlu0 %460
        %s463 = sor.u32 256, 8
        %464 = vbcast.lane.b32.xlu0 %v458, %s463
        %v465 = vpop.permute.xlu0 %464
        %s467 = sor.u32 256, 16
        %468 = vbcast.lane.b32.xlu0 %v458, %s467
        %v469 = vpop.permute.xlu0 %468
        %s471 = sor.u32 256, 24
        %472 = vbcast.lane.b32.xlu0 %v458, %s471
        %v473 = vpop.permute.xlu0 %472
        %v474 = vmul.f32 %v243, %v461
        %v475 = vmul.f32 %v244, %v465
        %v476 = vmul.f32 %v245, %v469
        %v477 = vmul.f32 %v246, %v473
        %478 = vst [vmem:[%s242] sm:$0xff] %v474
        %479 = vst [vmem:[%s242 + $0x8] sm:$0xff] %v475
        %480 = vst [vmem:[%s242 + $0x10] sm:$0xff] %v476
        %481 = vst [vmem:[%s242 + $0x18] sm:$0xff] %v477
        %s482 = sand.u32 %s140, 1
        %s483 = scalar_lea.sflag [#allocation4], %s482
        %s484 = sand.u32 %s140, 1
        %s485 = smul.addr %s484, 32
        %s486 = scalar_lea.vmem [#allocation5], %s485
        // Predicated region
        $region45: #{tpu_custom_call.1} parent=39 // pred_check
          %p487 = pneg %p150
        $region46: #{tpu_custom_call.1} parent=39 // pred_check_branch
          %489 = sbr.rel (%p487) target = $region48
        $region47: #{tpu_custom_call.1} parent=39 // pred_region
          %s491 = ssub.s32 512, 512
          %492 = vsyncadd %s483, %s491
          %s493 = smul.addr %s22, 4
          %s494 = smul.addr %s493, 128
          %s495 = scalar_lea.hbm %s5, %s494
          %s496 = sshll.u32 %s486, 4
          %s497 = int_to_ptr.vmem [resolvable:$true] %s496
          %502 = dma.vmem_to_hbm [thread:$0]  %s497, 512, %s495, %s483, 128, 128, 8
        $region48: #{tpu_custom_call.1} parent=39 // pred_fallthru
          _
      $region40: #{tpu_custom_call.1} parent=5 // pred_fallthru
        _
      %p503 = scmp.le.s32.totalorder 2, %s17
      // Predicated region
      $region49: #{tpu_custom_call.1} parent=5 // pred_check
        %p504 = pneg %p503
      $region50: #{tpu_custom_call.1} parent=5 // pred_check_branch
        %506 = sbr.rel (%p504) target = $region52
      $region51: #{tpu_custom_call.1} parent=5 // pred_region
        %s507 = ssub.s32 %s17, 2
        // Predicated region
        $region53: #{tpu_custom_call.1} parent=51 // pred_check
          %p508 = pneg %p156
        $region54: #{tpu_custom_call.1} parent=51 // pred_check_branch
          %510 = sbr.rel (%p508) target = $region56
        $region55: #{tpu_custom_call.1} parent=51 // pred_region
          %s511 = sand.u32 %s141, 1
          %s512 = scalar_lea.sflag [#allocation4], %s511
          %s513 = sand.u32 %s141, 1
          %s514 = smul.addr %s513, 32
          %s515 = scalar_lea.vmem [#allocation5], %s514
          %516 = dma.done %s512, 512
        $region56: #{tpu_custom_call.1} parent=51 // pred_fallthru
          _
      $region52: #{tpu_custom_call.1} parent=5 // pred_fallthru
        _
    $region6: #{tpu_custom_call.1} parent=1 // loop_footer
      %s21 = sadd.s32 1, %s17
    $region7: #{tpu_custom_call.1} parent=1 // loop_footer_branch
      %16 = sbr.rel target = $region3
    $region8: #{tpu_custom_call.1} parent=1 // loop_exit
      _
    %517 = vsyncpa [#allocation3], 1
    %s518 = scalar_lea.sflag [#allocation3], 1
    %519 = vsyncpa %s518, 1
    %520 = vsyncpa [#allocation4], 1
    %s521 = scalar_lea.sflag [#allocation4], 1
    %522 = vsyncpa %s521, 1

</llo_original>
